<compile_context>
chip_gen: v7x
topology: tpu7x:2x2x1
jax: 0.10.0
libtpu: 0.0.40
codegen_flags: <defaults>
</compile_context>

<pallas_src>
import jax
import jax.numpy as jnp
from jax.experimental import pallas as pl
from jax.experimental.pallas import tpu as pltpu

# ----------------------------- shapes ---------------------------------------
B = 2            # batch
N_VERT = 256     # synthetic number of BFM vertices
ID_DIM = 32      # identity coeffs
EX_DIM = 16      # expression coeffs
PARAM_DIM = ID_DIM + EX_DIM          # 48
N_KPT = 68       # 68 facial landmarks
KPT_XY = 2 * N_KPT                   # 136 keypoint x/y columns
LANE_PAD = 256                       # lane-dense pad of the 136 columns


# --------------------------- fused Pallas kernel ------------------------------
def shape_loss_kernel(inp_ref, gt_ref, pw_ref, basis_ref, wgt_ref, wpw_ref, out_ref):
    # The BFM mean cancels in the differences, so only the basis matmul remains:
    #   lm - gt = (inp - gt) @ basis_kpt ,  lm - pw = (inp - Pw) @ basis_kpt
    d_gt = inp_ref[...] - gt_ref[...]                                   # [B, 48]
    d_pw = inp_ref[...] - pw_ref[...]                                   # [B, 48]
    e_gt = jnp.dot(d_gt, basis_ref[...],
                   preferred_element_type=jnp.float32)                  # [B, 256]
    e_pw = jnp.dot(d_pw, basis_ref[...],
                   preferred_element_type=jnp.float32)                  # [B, 256]

    # Per-lane weights already fold the sliced-mean denominators and the /17,
    # /51 normalizers; padded lanes 136..255 carry zero weight (and the padded
    # basis columns are zero), so the lane padding is numerically inert.
    loss = (jnp.sum(wgt_ref[...] * e_gt * e_gt)
            + jnp.sum(wpw_ref[...] * e_pw * e_pw))

    # Scalar SMEM output: no vreg broadcast, no vector-store DMA.
    out_ref[0, 0] = loss


# ------------------------------ init-time prep --------------------------------
def prepare_landmark_bfm(basis_t, keypoints):
    """Pre-gather the BFM basis to keypoint x/y columns and lane-pad to 256.

    Column index for landmark l, coord c in {x=0, y=1} is keypoints[l]*3 + c,
    matching face_shape.reshape(M, N_VERT, 3)[:, keypoints, :2] flattened.
    Done once at "__init__" time.
    """
    kpt_cols = (keypoints[:, None] * 3 + jnp.arange(2)[None, :]).reshape(-1)   # [136]
    basis_kpt = jnp.take(basis_t, kpt_cols, axis=1)                            # [48, 136]
    basis_kpt = jnp.pad(basis_kpt, ((0, 0), (0, LANE_PAD - KPT_XY)))           # [48, 256]
    return basis_kpt.astype(jnp.float32)


def prepare_loss_weights(batch):
    """Per-lane weights folding mean() denominators and /17, /51 factors."""
    l = jnp.arange(N_KPT)
    # edge loss: landmarks 0..16 vs gt:   mean over B*17*2 elems, then /17
    w_gt_l = jnp.where(l < 17, 1.0 / (batch * 17 * 2 * 17.0), 0.0)
    # landmark loss vs Pw: 100*mean(mouth 48..67)/51 + 20*mean(left 17..47)/51
    w_pw_l = jnp.where(
        l >= 48,
        100.0 / (batch * 20 * 2 * 51.0),
        jnp.where(l >= 17, 20.0 / (batch * 31 * 2 * 51.0), 0.0),
    )
    w_gt = jnp.pad(jnp.repeat(w_gt_l, 2), (0, LANE_PAD - KPT_XY))[None, :]     # [1, 256]
    w_pw = jnp.pad(jnp.repeat(w_pw_l, 2), (0, LANE_PAD - KPT_XY))[None, :]     # [1, 256]
    return w_gt.astype(jnp.float32), w_pw.astype(jnp.float32)


# ------------------------------ hot-path wrapper -------------------------------
def shape_loss(inp_param, gt_param, Pw, basis_kpt, w_gt, w_pw):
    vmem = pl.BlockSpec(memory_space=pltpu.MemorySpace.VMEM)
    smem = pl.BlockSpec(memory_space=pltpu.MemorySpace.SMEM)
    out = pl.pallas_call(
        shape_loss_kernel,
        out_shape=jax.ShapeDtypeStruct((1, 1), jnp.float32),
        in_specs=[vmem, vmem, vmem, vmem, vmem, vmem],
        out_specs=smem,
        cost_estimate=pl.CostEstimate(
            flops=2 * 2 * B * PARAM_DIM * LANE_PAD,
            transcendentals=0,
            bytes_accessed=4 * (3 * B * PARAM_DIM
                                + PARAM_DIM * LANE_PAD
                                + 2 * LANE_PAD + 1),
        ),
    )(inp_param, gt_param, Pw, basis_kpt, w_gt, w_pw)
    return out[0, 0]


# --------------------------- pure-JAX reference -------------------------------
def shape_loss_ref(inp_param, gt_param, Pw, basis_t, mean_flat, keypoints):
    def recon(p):
        return (mean_flat + p @ basis_t).reshape(p.shape[0], N_VERT, 3)

    lm = jnp.take(recon(inp_param), keypoints, axis=1)[:, :, :2]
    gt = jnp.take(recon(gt_param), keypoints, axis=1)[:, :, :2]
    pw = jnp.take(recon(Pw), keypoints, axis=1)[:, :, :2]

    loss_edge = jnp.mean((gt[:, :17] - lm[:, :17]) ** 2) / 17.0
    loss_org = (
        100.0 * jnp.mean((lm[:, 48:68] - pw[:, 48:68]) ** 2)
        + 20.0 * jnp.mean((lm[:, 17:48] - pw[:, 17:48]) ** 2)
    ) / 51.0
    return loss_edge + loss_org


# ------------------------------- main ------------------------------------------
if __name__ == "__main__":
    key = jax.random.PRNGKey(0)
    k1, k2, k3, k4, k5 = jax.random.split(key, 5)

    # Deterministic synthetic BFM (no file loads).
    mean_flat = jax.random.normal(k1, (1, 3 * N_VERT), dtype=jnp.float32)
    basis_t = 0.1 * jax.random.normal(
        k2, (PARAM_DIM, 3 * N_VERT), dtype=jnp.float32
    )
    keypoints = jnp.arange(N_KPT, dtype=jnp.int32) * 3  # 68 distinct vertex ids

    inp_param = jax.random.normal(k3, (B, PARAM_DIM), dtype=jnp.float32)
    gt_param = jax.random.normal(k4, (B, PARAM_DIM), dtype=jnp.float32)
    Pw = jax.random.normal(k5, (B, PARAM_DIM), dtype=jnp.float32)

    # "__init__"-time prep: pre-gathered lane-padded basis + folded loss weights.
    basis_kpt = prepare_landmark_bfm(basis_t, keypoints)
    w_gt, w_pw = prepare_loss_weights(B)

    loss = shape_loss(inp_param, gt_param, Pw, basis_kpt, w_gt, w_pw)
    loss = jax.block_until_ready(loss)

    ref = shape_loss_ref(inp_param, gt_param, Pw, basis_t, mean_flat, keypoints)
    assert abs(float(loss) - float(ref)) < 1e-4, (float(loss), float(ref))

    print("KERNEL_OK")
</pallas_src>

<mosaic_0001>
module attributes {stable_mosaic.version = 11 : i64} {
  func.func @shape_loss_kernel(%arg0: memref<2x48xf32, #tpu.memory_space<vmem>>, %arg1: memref<2x48xf32, #tpu.memory_space<vmem>>, %arg2: memref<2x48xf32, #tpu.memory_space<vmem>>, %arg3: memref<48x256xf32, #tpu.memory_space<vmem>>, %arg4: memref<1x256xf32, #tpu.memory_space<vmem>>, %arg5: memref<1x256xf32, #tpu.memory_space<vmem>>, %arg6: memref<1x1xf32, #tpu.memory_space<smem>>) attributes {dimension_semantics = [], scalar_prefetch = 0 : i64, scratch_operands = 0 : i64, tpu.core_type = #tpu.core_type<tc>} {
    %c0 = arith.constant 0 : index
    %c0_0 = arith.constant 0 : index
    %0 = vector.load %arg0[%c0, %c0_0] : memref<2x48xf32, #tpu.memory_space<vmem>>, vector<2x48xf32>
    %c0_1 = arith.constant 0 : index
    %c0_2 = arith.constant 0 : index
    %1 = vector.load %arg1[%c0_1, %c0_2] : memref<2x48xf32, #tpu.memory_space<vmem>>, vector<2x48xf32>
    %2 = arith.subf %0, %1 : vector<2x48xf32>
    %c0_3 = arith.constant 0 : index
    %c0_4 = arith.constant 0 : index
    %3 = vector.load %arg0[%c0_3, %c0_4] : memref<2x48xf32, #tpu.memory_space<vmem>>, vector<2x48xf32>
    %c0_5 = arith.constant 0 : index
    %c0_6 = arith.constant 0 : index
    %4 = vector.load %arg2[%c0_5, %c0_6] : memref<2x48xf32, #tpu.memory_space<vmem>>, vector<2x48xf32>
    %5 = arith.subf %3, %4 : vector<2x48xf32>
    %c0_7 = arith.constant 0 : index
    %c0_8 = arith.constant 0 : index
    %6 = vector.load %arg3[%c0_7, %c0_8] : memref<48x256xf32, #tpu.memory_space<vmem>>, vector<48x256xf32>
    %cst = arith.constant dense<0.000000e+00> : vector<2x256xf32>
    %7 = tpu.matmul %2, %6, %cst {dimension_numbers = #tpu.dot_dimension_numbers<[1], [0], [0], [1], [0, 0, 1, 1], [], []>} : vector<2x48xf32>, vector<48x256xf32>, vector<2x256xf32> -> vector<2x256xf32>
    %c0_9 = arith.constant 0 : index
    %c0_10 = arith.constant 0 : index
    %8 = vector.load %arg3[%c0_9, %c0_10] : memref<48x256xf32, #tpu.memory_space<vmem>>, vector<48x256xf32>
    %cst_11 = arith.constant dense<0.000000e+00> : vector<2x256xf32>
    %9 = tpu.matmul %5, %8, %cst_11 {dimension_numbers = #tpu.dot_dimension_numbers<[1], [0], [0], [1], [0, 0, 1, 1], [], []>} : vector<2x48xf32>, vector<48x256xf32>, vector<2x256xf32> -> vector<2x256xf32>
    %c0_12 = arith.constant 0 : index
    %c0_13 = arith.constant 0 : index
    %10 = vector.load %arg4[%c0_12, %c0_13] : memref<1x256xf32, #tpu.memory_space<vmem>>, vector<1x256xf32>
    %11 = vector.broadcast %10 : vector<1x256xf32> to vector<2x256xf32>
    %12 = arith.mulf %11, %7 : vector<2x256xf32>
    %13 = arith.mulf %12, %7 : vector<2x256xf32>
    %14 = vector.shape_cast %13 : vector<2x256xf32> to vector<1x2x256xf32>
    %cst_14 = arith.constant dense<0.000000e+00> : vector<1xf32>
    %15 = vector.multi_reduction <add>, %14, %cst_14 [1, 2] : vector<1x2x256xf32> to vector<1xf32>
    %16 = vector.shape_cast %15 : vector<1xf32> to vector<1x1x1xf32>
    %17 = vector.extract %16[0, 0, 0] : f32 from vector<1x1x1xf32>
    %c0_15 = arith.constant 0 : index
    %c0_16 = arith.constant 0 : index
    %18 = vector.load %arg5[%c0_15, %c0_16] : memref<1x256xf32, #tpu.memory_space<vmem>>, vector<1x256xf32>
    %19 = vector.broadcast %18 : vector<1x256xf32> to vector<2x256xf32>
    %20 = arith.mulf %19, %9 : vector<2x256xf32>
    %21 = arith.mulf %20, %9 : vector<2x256xf32>
    %22 = vector.shape_cast %21 : vector<2x256xf32> to vector<1x2x256xf32>
    %cst_17 = arith.constant dense<0.000000e+00> : vector<1xf32>
    %23 = vector.multi_reduction <add>, %22, %cst_17 [1, 2] : vector<1x2x256xf32> to vector<1xf32>
    %24 = vector.shape_cast %23 : vector<1xf32> to vector<1x1x1xf32>
    %25 = vector.extract %24[0, 0, 0] : f32 from vector<1x1x1xf32>
    %26 = arith.addf %17, %25 : f32
    %c0_18 = arith.constant 0 : index
    %c0_19 = arith.constant 0 : index
    %27 = memref.load %arg6[%c0_18, %c0_19] : memref<1x1xf32, #tpu.memory_space<smem>>
    memref.store %26, %arg6[%c0_18, %c0_19] : memref<1x1xf32, #tpu.memory_space<smem>>
    return
  }
}

</mosaic_0001>

<llo_original>
// kernel: tpu_custom_call.1
$region0: #{tpu_custom_call.1}
  #allocation0 [shape = 'u32[]', space=smem, size = 0x4, offset = 0x4, fixed_abs, tag = 'smem constant byte address 0x4 - core index']
  #allocation1 [shape = 'u32[144,128]{1,0:T(1,128)}', space=vmem, size = 0x12000, scoped, tag = 'internal scratch']
  %s0 = inlined_call_operand.hbm [shape: f32[2,48], index: 0, kind: input, shape index: {}]
  %s1 = inlined_call_operand.vmem [shape: f32[2,48], index: 1, kind: input, shape index: {}]
  %s2 = inlined_call_operand.vmem [shape: f32[2,48], index: 2, kind: input, shape index: {}]
  %s3 = inlined_call_operand.hbm [shape: f32[48,256], index: 3, kind: input, shape index: {}]
  %s4 = inlined_call_operand.vmem [shape: f32[1,256], index: 4, kind: input, shape index: {}]
  %s5 = inlined_call_operand.vmem [shape: f32[1,256], index: 5, kind: input, shape index: {}]
  %s6 = inlined_call_operand.hbm [shape: f32[1,1], index: 6, kind: output, shape index: {}]
  %s7 = sld [smem:[#allocation0]]
  $region42: #{tpu_custom_call.1} parent=0
    _
  %s9 = ssub.s32 1, %s7
  %s10 = scalar_select 0, %s9, %s7
  $region1: #{tpu_custom_call.1} parent=0
    #allocation2 [shape = 'u8[1024]{0}', space=vmem, size = 0x400, scoped, tag = 'input window, operand 0, single buffered']
    #allocation3 [shape = 's32[1]{0}', space=sflag, size = 0x4, scoped, tag = 'scoped memory for tpu_custom_call.1']
    #allocation4 [shape = 's32[1]{0}', space=sflag, size = 0x4, scoped, tag = 'scoped memory for tpu_custom_call.1']
    #allocation5 [shape = 'u8[49152]{0}', space=vmem, size = 0xc000, scoped, tag = 'input window, operand 3, single buffered']
    #allocation6 [shape = 's32[1]{0}', space=sflag, size = 0x4, scoped, tag = 'scoped memory for tpu_custom_call.1']
    #allocation7 [shape = 'u8[512]{0}', space=smem, size = 0x200, scoped, tag = 'output window, operand 0, single buffered']
    %11 = vsyncpa [#allocation3], 0
    %12 = vsyncpa [#allocation6], 0
    %13 = vsyncpa [#allocation4], 0
    // Predicated region
    $region2: #{tpu_custom_call.1} parent=1 // pred_check
      _
    $region3: #{tpu_custom_call.1} parent=1 // pred_check_branch
      %15 = sbr.rel (0) target = $region5
    $region4: #{tpu_custom_call.1} parent=1 // pred_region
      %s17 = ssub.s32 32, 32
      %18 = vsyncadd [#allocation3], %s17
      %s20 = sshll.u32 [#allocation2], 4
      %s21 = int_to_ptr.vmem [resolvable:$true] %s20
      %23 = dma.hbm_to_vmem [thread:$0]  %s0, 32, %s21, [#allocation3]
    $region5: #{tpu_custom_call.1} parent=1 // pred_fallthru
      _
    // Predicated region
    $region6: #{tpu_custom_call.1} parent=1 // pred_check
      _
    $region7: #{tpu_custom_call.1} parent=1 // pred_check_branch
      %25 = sbr.rel (0) target = $region9
    $region8: #{tpu_custom_call.1} parent=1 // pred_region
      _
    $region9: #{tpu_custom_call.1} parent=1 // pred_fallthru
      _
    // Predicated region
    $region10: #{tpu_custom_call.1} parent=1 // pred_check
      _
    $region11: #{tpu_custom_call.1} parent=1 // pred_check_branch
      %27 = sbr.rel (0) target = $region13
    $region12: #{tpu_custom_call.1} parent=1 // pred_region
      _
    $region13: #{tpu_custom_call.1} parent=1 // pred_fallthru
      _
    // Predicated region
    $region14: #{tpu_custom_call.1} parent=1 // pred_check
      _
    $region15: #{tpu_custom_call.1} parent=1 // pred_check_branch
      %29 = sbr.rel (0) target = $region17
    $region16: #{tpu_custom_call.1} parent=1 // pred_region
      %s31 = ssub.s32 1536, 1536
      %32 = vsyncadd [#allocation6], %s31
      %s33 = sshll.u32 [#allocation5], 4
      %s34 = int_to_ptr.vmem [resolvable:$true] %s33
      %39 = dma.hbm_to_vmem [thread:$0]  %s3, 1536, %s34, [#allocation6], 256, 256, 16
    $region17: #{tpu_custom_call.1} parent=1 // pred_fallthru
      _
    // Predicated region
    $region18: #{tpu_custom_call.1} parent=1 // pred_check
      _
    $region19: #{tpu_custom_call.1} parent=1 // pred_check_branch
      %41 = sbr.rel (0) target = $region21
    $region20: #{tpu_custom_call.1} parent=1 // pred_region
      _
    $region21: #{tpu_custom_call.1} parent=1 // pred_fallthru
      _
    // Predicated region
    $region22: #{tpu_custom_call.1} parent=1 // pred_check
      _
    $region23: #{tpu_custom_call.1} parent=1 // pred_check_branch
      %43 = sbr.rel (0) target = $region25
    $region24: #{tpu_custom_call.1} parent=1 // pred_region
      _
    $region25: #{tpu_custom_call.1} parent=1 // pred_fallthru
      _
    // Predicated region
    $region26: #{tpu_custom_call.1} parent=1 // pred_check
      _
    $region27: #{tpu_custom_call.1} parent=1 // pred_check_branch
      %45 = sbr.rel (0) target = $region29
    $region28: #{tpu_custom_call.1} parent=1 // pred_region
      %46 = dma.done [#allocation3], 32
    $region29: #{tpu_custom_call.1} parent=1 // pred_fallthru
      _
    // Predicated region
    $region30: #{tpu_custom_call.1} parent=1 // pred_check
      _
    $region31: #{tpu_custom_call.1} parent=1 // pred_check_branch
      %48 = sbr.rel (0) target = $region33
    $region32: #{tpu_custom_call.1} parent=1 // pred_region
      %49 = dma.done [#allocation6], 1536
    $region33: #{tpu_custom_call.1} parent=1 // pred_fallthru
      _
    %v50 = vld [vmem:[#allocation2] sm:$0x3]
    %v51 = vld [vmem:[%s1] sm:$0x3]
    %v52 = vsub.f32 %v50, %v51
    %v53 = vld [vmem:[%s2] sm:$0x3]
    %v54 = vsub.f32 %v50, %v53
    %v55 = vld [vmem:[#allocation5] sm:$0xff]
    %v56 = vld [vmem:[#allocation5 + $0x8] sm:$0xff]
    %v57 = vld [vmem:[#allocation5 + $0x10] sm:$0xff]
    %v58 = vld [vmem:[#allocation5 + $0x18] sm:$0xff]
    %v59 = vld [vmem:[#allocation5 + $0x20] sm:$0xff]
    %v60 = vld [vmem:[#allocation5 + $0x28] sm:$0xff]
    %v61 = vld [vmem:[#allocation5 + $0x30] sm:$0xff]
    %v62 = vld [vmem:[#allocation5 + $0x38] sm:$0xff]
    %v63 = vld [vmem:[#allocation5 + $0x40] sm:$0xff]
    %v64 = vld [vmem:[#allocation5 + $0x48] sm:$0xff]
    %v65 = vld [vmem:[#allocation5 + $0x50] sm:$0xff]
    %v66 = vld [vmem:[#allocation5 + $0x58] sm:$0xff]
    %vm67 = vcmask 392192
    %v69 = vsel %vm67, %v52, 0
    %71 = vmatprep.subr.mxu0 %v56
    %72 = vmatpush1.msra.mxu0 %v55
    %73 = vmatprep.subr.mxu0 %v58
    %74 = vmatpush1.msra.mxu0 %v57
    %75 = vmatprep.subr.mxu0 %v60
    %76 = vmatpush1.msra.mxu0 %v59
    %77 = vmatprep.subr.mxu0 %v62
    %78 = vmatpush1.msra.mxu0 %v61
    %79 = vmatprep.subr.mxu0 %v64
    %80 = vmatpush1.msra.mxu0 %v63
    %81 = vmatprep.subr.mxu0 %v66
    %82 = vmatpush1.msra.mxu0 %v65
    %83 = vmatprep.subr.mxu0 0.0
    %84 = vmatpush1.msra.mxu0 0.0
    %85 = vmatprep.subr.mxu0 0.0
    %86 = vmatpush1.msra.mxu0 0.0
    %87 = vmatprep.subr.mxu0 0.0
    %88 = vmatpush1.msra.mxu0 0.0
    %89 = vmatprep.subr.mxu0 0.0
    %90 = vmatpush1.msra.mxu0 0.0
    %91 = vmatprep.subr.mxu0 0.0
    %92 = vmatpush1.msra.mxu0 0.0
    %93 = vmatprep.subr.mxu0 0.0
    %94 = vmatpush1.msra.mxu0 0.0
    %95 = vmatprep.subr.mxu0 0.0
    %96 = vmatpush1.msra.mxu0 0.0
    %97 = vmatprep.subr.mxu0 0.0
    %98 = vmatpush1.msra.mxu0 0.0
    %99 = vmatprep.subr.mxu0 0.0
    %100 = vmatpush1.msra.mxu0 0.0
    %101 = vmatprep.subr.mxu0 0.0
    %102 = vmatpush1.msra.mxu0 0.0
    %103 = vmatprep.subr.mxu0 0.0
    %104 = vmatpush1.msra.mxu0 0.0
    %105 = vmatprep.subr.mxu0 0.0
    %106 = vmatpush1.msra.mxu0 0.0
    %107 = vmatprep.subr.mxu0 0.0
    %108 = vmatpush1.msra.mxu0 0.0
    %109 = vmatprep.subr.mxu0 0.0
    %110 = vmatpush1.msra.mxu0 0.0
    %111 = vmatprep.subr.mxu0 0.0
    %112 = vmatpush1.msra.mxu0 0.0
    %113 = vmatprep.subr.mxu0 0.0
    %114 = vmatpush1.msra.mxu0 0.0
    %115 = vmatprep.subr.mxu0 0.0
    %116 = vmatpush1.msra.mxu0 0.0
    %117 = vmatprep.subr.mxu0 0.0
    %118 = vmatpush1.msra.mxu0 0.0
    %119 = vmatprep.subr.mxu0 0.0
    %120 = vmatpush1.msra.mxu0 0.0
    %121 = vmatprep.subr.mxu0 0.0
    %122 = vmatpush1.msra.mxu0 0.0
    %123 = vmatprep.subr.mxu0 0.0
    %124 = vmatpush1.msra.mxu0 0.0
    %125 = vmatprep.subr.mxu0 0.0
    %126 = vmatpush1.msra.mxu0 0.0
    %127 = vmatprep.subr.mxu0 0.0
    %128 = vmatpush1.msra.mxu0 0.0
    %129 = vmatprep.subr.mxu0 0.0
    %130 = vmatpush1.msra.mxu0 0.0
    %131 = vmatprep.subr.mxu0 0.0
    %132 = vmatpush1.msra.mxu0 0.0
    %133 = vmatprep.subr.mxu0 0.0
    %134 = vmatpush1.msra.mxu0 0.0
    %135 = vmatprep.mubr.f32.mxu0 0.0
    %136 = vmatmul.mubr.f32.gmra.mrb[0].mxu0 %v69
    %v137 = vpop.f32.mrb[0].mxu0
    %v138 = vadd.f32 0.0, %v137
    %v139 = vpop.f32.mrb[0].mxu0
    %v140 = vadd.f32 0.0, %v139
    %141 = vdwg.mxu0
    %v143 = vsel %vm67, %v54, 0
    %145 = vmatprep.subr.mxu0 %v56
    %146 = vmatpush1.msra.mxu0 %v55
    %147 = vmatprep.subr.mxu0 %v58
    %148 = vmatpush1.msra.mxu0 %v57
    %149 = vmatprep.subr.mxu0 %v60
    %150 = vmatpush1.msra.mxu0 %v59
    %151 = vmatprep.subr.mxu0 %v62
    %152 = vmatpush1.msra.mxu0 %v61
    %153 = vmatprep.subr.mxu0 %v64
    %154 = vmatpush1.msra.mxu0 %v63
    %155 = vmatprep.subr.mxu0 %v66
    %156 = vmatpush1.msra.mxu0 %v65
    %157 = vmatprep.subr.mxu0 0.0
    %158 = vmatpush1.msra.mxu0 0.0
    %159 = vmatprep.subr.mxu0 0.0
    %160 = vmatpush1.msra.mxu0 0.0
    %161 = vmatprep.subr.mxu0 0.0
    %162 = vmatpush1.msra.mxu0 0.0
    %163 = vmatprep.subr.mxu0 0.0
    %164 = vmatpush1.msra.mxu0 0.0
    %165 = vmatprep.subr.mxu0 0.0
    %166 = vmatpush1.msra.mxu0 0.0
    %167 = vmatprep.subr.mxu0 0.0
    %168 = vmatpush1.msra.mxu0 0.0
    %169 = vmatprep.subr.mxu0 0.0
    %170 = vmatpush1.msra.mxu0 0.0
    %171 = vmatprep.subr.mxu0 0.0
    %172 = vmatpush1.msra.mxu0 0.0
    %173 = vmatprep.subr.mxu0 0.0
    %174 = vmatpush1.msra.mxu0 0.0
    %175 = vmatprep.subr.mxu0 0.0
    %176 = vmatpush1.msra.mxu0 0.0
    %177 = vmatprep.subr.mxu0 0.0
    %178 = vmatpush1.msra.mxu0 0.0
    %179 = vmatprep.subr.mxu0 0.0
    %180 = vmatpush1.msra.mxu0 0.0
    %181 = vmatprep.subr.mxu0 0.0
    %182 = vmatpush1.msra.mxu0 0.0
    %183 = vmatprep.subr.mxu0 0.0
    %184 = vmatpush1.msra.mxu0 0.0
    %185 = vmatprep.subr.mxu0 0.0
    %186 = vmatpush1.msra.mxu0 0.0
    %187 = vmatprep.subr.mxu0 0.0
    %188 = vmatpush1.msra.mxu0 0.0
    %189 = vmatprep.subr.mxu0 0.0
    %190 = vmatpush1.msra.mxu0 0.0
    %191 = vmatprep.subr.mxu0 0.0
    %192 = vmatpush1.msra.mxu0 0.0
    %193 = vmatprep.subr.mxu0 0.0
    %194 = vmatpush1.msra.mxu0 0.0
    %195 = vmatprep.subr.mxu0 0.0
    %196 = vmatpush1.msra.mxu0 0.0
    %197 = vmatprep.subr.mxu0 0.0
    %198 = vmatpush1.msra.mxu0 0.0
    %199 = vmatprep.subr.mxu0 0.0
    %200 = vmatpush1.msra.mxu0 0.0
    %201 = vmatprep.subr.mxu0 0.0
    %202 = vmatpush1.msra.mxu0 0.0
    %203 = vmatprep.subr.mxu0 0.0
    %204 = vmatpush1.msra.mxu0 0.0
    %205 = vmatprep.subr.mxu0 0.0
    %206 = vmatpush1.msra.mxu0 0.0
    %207 = vmatprep.subr.mxu0 0.0
    %208 = vmatpush1.msra.mxu0 0.0
    %209 = vmatprep.mubr.f32.mxu0 0.0
    %210 = vmatmul.mubr.f32.gmra.mrb[0].mxu0 %v143
    %v211 = vpop.f32.mrb[0].mxu0
    %v212 = vadd.f32 0.0, %v211
    %v213 = vpop.f32.mrb[0].mxu0
    %v214 = vadd.f32 0.0, %v213
    %215 = vdwg.mxu0
    %v216 = vld [vmem:[%s4] sm:$0x3]
    %v218 = vlaneseq
    %v219 = vshrl.u32 %v218, 7
    %v220 = vsub.s32 0, %v219
    %v221 = vrot.slane %v216, %v220
    %v222 = vlaneseq
    %v223 = vshrl.u32 %v222, 7
    %v224 = vsub.s32 1, %v223
    %v225 = vrot.slane %v216, %v224
    %v228 = vmul.f32 %v221, %v138
    %v229 = vmul.f32 %v225, %v140
    %v230 = vmul.f32 %v228, %v138
    %v231 = vmul.f32 %v229, %v140
    %vm232 = vcmask 1041408
    %v233 = vsel %vm232, %v230, 0.0
    %v234 = vsel %vm232, %v231, 0.0
    %v235 = vadd.f32 %v233, %v234
    %236 = vadd.xlane.f32.xlu0 %v235
    %v237 = vpop.xlane.xlu0 %236
    %v238 = vrot.slane %v237, 4
    %v239 = vadd.f32 %v237, %v238
    %v240 = vrot.slane %v239, 2
    %v241 = vadd.f32 %v239, %v240
    %v242 = vrot.slane %v241, 1
    %v243 = vadd.f32 %v241, %v242
    %s244 = vtos %v243
    %v245 = vld [vmem:[%s5] sm:$0x3]
    %v247 = vlaneseq
    %v248 = vshrl.u32 %v247, 7
    %v249 = vsub.s32 0, %v248
    %v250 = vrot.slane %v245, %v249
    %v251 = vlaneseq
    %v252 = vshrl.u32 %v251, 7
    %v253 = vsub.s32 1, %v252
    %v254 = vrot.slane %v245, %v253
    %v257 = vmul.f32 %v250, %v212
    %v258 = vmul.f32 %v254, %v214
    %v259 = vmul.f32 %v257, %v212
    %v260 = vmul.f32 %v258, %v214
    %v261 = vsel %vm232, %v259, 0.0
    %v262 = vsel %vm232, %v260, 0.0
    %v263 = vadd.f32 %v261, %v262
    %264 = vadd.xlane.f32.xlu0 %v263
    %v265 = vpop.xlane.xlu0 %264
    %v266 = vrot.slane %v265, 4
    %v267 = vadd.f32 %v265, %v266
    %v268 = vrot.slane %v267, 2
    %v269 = vadd.f32 %v267, %v268
    %v270 = vrot.slane %v269, 1
    %v271 = vadd.f32 %v269, %v270
    %s272 = vtos %v271
    %s273 = sadd.f32 %s244, %s272
    %s274 = scalar_lea.smem [#allocation7], 0
    %275 = sst [smem:[%s274]] %s273
    // Predicated region
    $region34: #{tpu_custom_call.1} parent=1 // pred_check
      _
    $region35: #{tpu_custom_call.1} parent=1 // pred_check_branch
      %277 = sbr.rel (0) target = $region37
    $region36: #{tpu_custom_call.1} parent=1 // pred_region
      %s279 = ssub.s32 16, 16
      %280 = vsyncadd [#allocation4], %s279
      %283 = dma.smem_to_hbm [#allocation7], 16, %s6, [#allocation4]
    $region37: #{tpu_custom_call.1} parent=1 // pred_fallthru
      _
    // Predicated region
    $region38: #{tpu_custom_call.1} parent=1 // pred_check
      _
    $region39: #{tpu_custom_call.1} parent=1 // pred_check_branch
      %285 = sbr.rel (0) target = $region41
    $region40: #{tpu_custom_call.1} parent=1 // pred_region
      %286 = dma.done [#allocation4], 16
    $region41: #{tpu_custom_call.1} parent=1 // pred_fallthru
      _
    %287 = sfence
    %288 = vsyncpa [#allocation3], 1
    %289 = vsyncpa [#allocation6], 1
    %290 = vsyncpa [#allocation4], 1

</llo_original>
